<compile_context>
chip_gen: v7x
topology: tpu7x:2x2x1
jax: 0.10.0
libtpu: 0.0.40
codegen_flags: <defaults>
</compile_context>

<pallas_src>
import math

import jax
import jax.numpy as jnp
from jax.experimental import pallas as pl
from jax.experimental.pallas import tpu as pltpu


def _c2g_kernel(graph_ref, img_ref,
                wq_t_ref, bq_ref, wkv_ref, bkv_ref, wc_t_ref, bc_ref,
                out_ref, msg_ref):
    """One (batch-block, L-tile) grid step.

    graph_ref : (Bt, N, 32)  f32, resident across the L sweep
    img_ref   : (Bt, C, TL)  image tile (f32 or bf16)
    wq_t_ref  : (32, G) = Wq^T        bq_ref  : (1, G)
    wkv_ref   : (2G, C) = [Wk; Wv]    bkv_ref : (2G, 1)
    wc_t_ref  : (G, G)  = Wc^T        bc_ref  : (1, G)
    out_ref   : (Bt, N, G)  written on the last L tile only
    msg_ref   : (Bt, N, G)  f32 VMEM accumulator across L tiles
    """
    l_idx = pl.program_id(1)
    num_l = pl.num_programs(1)
    bt = graph_ref.shape[0]
    g_chan = wc_t_ref.shape[0]
    inv_sqrt_g = 1.0 / math.sqrt(float(g_chan))

    @pl.when(l_idx == 0)
    def _init():
        msg_ref[...] = jnp.zeros_like(msg_ref)

    wkv = wkv_ref[...]
    bkv = bkv_ref[...]
    wq_t = wq_t_ref[...]
    bq = bq_ref[...]

    # Static unroll over the Bt batch elements of this block.  (Mosaic lowers a batched
    # dot_general the same way -- one MXU matmul per batch element -- so unrolling keeps every
    # matmul in its canonical lhs-minor x rhs-second-minor layout and avoids 3-D relayouts.)
    for b in range(bt):
        img_b = img_ref[b]                                    # (C, TL)
        graph_b = graph_ref[b]                                # (N, 32) f32

        # Stacked K/V projection: one (2G, C) @ (C, TL) MXU matmul, f32 accumulation.
        kv = jnp.dot(wkv, img_b, preferred_element_type=jnp.float32) + bkv      # (2G, TL)
        k = kv[:g_chan, :]                                    # (G, TL)
        v = kv[g_chan:, :]                                    # (G, TL)

        # Q projection directly in (N, G): graph @ Wq^T + bq.
        q = jnp.dot(graph_b, wq_t, preferred_element_type=jnp.float32) + bq     # (N, G)

        # Attention logits (N, TL); softmax over the node axis (torch Softmax(dim=1)).
        # Each image column is independent, so tiling L is exact (no cross-tile state).
        logits = jnp.dot(q, k, preferred_element_type=jnp.float32) * inv_sqrt_g
        mx = jnp.max(logits, axis=0, keepdims=True)
        e = jnp.exp(logits - mx)
        att = e * pl.reciprocal(jnp.sum(e, axis=0, keepdims=True), approx=False)  # (N, TL)

        # Message contribution of this L tile, accumulated directly in (N, G):
        # contract L on both operands -> no explicit att / V transpose.
        cdt = img_b.dtype
        msg_ref[b] += jax.lax.dot_general(
            att.astype(cdt), v.astype(cdt),
            dimension_numbers=(((1,), (1,)), ((), ())),
            preferred_element_type=jnp.float32)               # (N, G)

    @pl.when(l_idx == num_l - 1)
    def _finalize():
        wc_t = wc_t_ref[...]
        bc = bc_ref[...]
        for b in range(bt):
            conv = jnp.dot(msg_ref[b], wc_t, preferred_element_type=jnp.float32) + bc
            out_ref[b] = (graph_ref[b].astype(jnp.float32) + conv).astype(out_ref.dtype)


def _largest_aligned_tile(L, C, bt, itemsize, max_tl=2048, tile_budget_bytes=2 << 20):
    """Largest multiple of 128 dividing L, capped by max_tl and a per-buffer VMEM budget."""
    if L % 128 != 0:
        return L                         # fall back to a full-L block (still a legal block shape)
    cap = max(1, tile_budget_bytes // max(1, bt * C * itemsize))
    cap = min(max_tl, (cap // 128) * 128)
    cap = max(128, cap)
    best, t = 128, 128
    while t <= min(L, cap):
        if L % t == 0:
            best = t
        t += 128
    return best


def _pick_batch_block(B, max_bt=8):
    """Largest divisor of B that still leaves >=2 batch-grid steps, so the 'parallel' batch axis
    can be split across TensorCores on v7x."""
    cap = max(1, min(max_bt, B // 2)) if B >= 2 else 1
    for d in range(cap, 0, -1):
        if B % d == 0:
            return d
    return 1


def connection_c2g(input_graph, input_image, params, *, bt=None, tl=None,
                   compute_dtype=jnp.float32):
    """input_graph: (B, N, 32), input_image: (B, C, H, W) -> (B, N, G) float32."""
    B, N, F = input_graph.shape
    _, C, H, W = input_image.shape
    L = H * W
    G = params["wq"].shape[0]
    assert F == 32 and G == 32, "residual add in the reference requires graph_channel == 32"

    cdt = jnp.dtype(compute_dtype)
    img_itemsize = cdt.itemsize

    if bt is None:
        bt = _pick_batch_block(B)
    assert B % bt == 0, f"batch block {bt} must divide B={B}"
    if tl is None:
        tl = _largest_aligned_tile(L, C, bt, img_itemsize)
    assert L % tl == 0, f"L tile {tl} must divide L={L}"
    num_l = L // tl

    input_graph = input_graph.astype(jnp.float32)
    img_flat = input_image.reshape(B, C, L).astype(cdt)       # image stream (optionally bf16)

    # Pre-packed weights: Wq^T / Wc^T so the kernel never transposes; Wk/Wv stacked so K and V
    # come from a single MXU matmul (doubles MXU row utilization at G=32).
    wq_t = params["wq"].T.astype(jnp.float32)                                  # (32, G)
    bq = params["bq"].reshape(1, G).astype(jnp.float32)
    wkv = jnp.concatenate([params["wk"], params["wv"]], axis=0).astype(cdt)    # (2G, C)
    bkv = jnp.concatenate([params["bk"], params["bv"]]).reshape(2 * G, 1).astype(jnp.float32)
    wc_t = params["wc"].T.astype(jnp.float32)                                  # (G, G)
    bc = params["bc"].reshape(1, G).astype(jnp.float32)

    grid = (B // bt, num_l)

    # Rough VMEM need (double-buffered blocks + live intermediates) -> explicit limit so the
    # pipeline depth stays predictable on v7x (64 MiB physical) as well as v5e/v6e (128 MiB).
    vmem_need = (
        2 * bt * C * tl * img_itemsize           # image tiles (double-buffered)
        + 2 * bt * N * F * 4                     # graph block
        + 2 * bt * N * G * 4                     # output block
        + bt * N * G * 4                         # message accumulator scratch
        + 2 * ((F * G + G * G) * 4 + 2 * G * C * img_itemsize + 4 * G * 4)   # weights + biases
        + bt * (2 * G + 2 * N) * tl * 4          # kv / logits / att intermediates
    )
    vmem_limit = int(min(max(2 * vmem_need + (4 << 20), 16 << 20), 56 << 20))

    cost = pl.CostEstimate(
        flops=int(2 * B * L * (2 * G) * C            # K/V projection
                  + 2 * B * N * F * G * num_l        # Q projection (recomputed per L tile)
                  + 2 * B * N * G * L                # QK^T
                  + 2 * B * N * G * L                # att @ V^T
                  + 2 * B * N * G * G),              # conv1
        transcendentals=int(B * N * L),
        bytes_accessed=int(B * C * L * img_itemsize + B * N * F * 4 + B * N * G * 4
                           + (F * G + G * G + 4 * G) * 4 + 2 * G * C * img_itemsize),
    )

    return pl.pallas_call(
        _c2g_kernel,
        out_shape=jax.ShapeDtypeStruct((B, N, G), jnp.float32),
        grid_spec=pltpu.PrefetchScalarGridSpec(
            num_scalar_prefetch=0,
            grid=grid,
            in_specs=[
                pl.BlockSpec((bt, N, F), lambda b, l: (b, 0, 0)),    # graph (resident over l)
                pl.BlockSpec((bt, C, tl), lambda b, l: (b, 0, l)),   # image tile
                pl.BlockSpec((F, G), lambda b, l: (0, 0)),           # Wq^T
                pl.BlockSpec((1, G), lambda b, l: (0, 0)),           # bq
                pl.BlockSpec((2 * G, C), lambda b, l: (0, 0)),       # [Wk; Wv]
                pl.BlockSpec((2 * G, 1), lambda b, l: (0, 0)),       # [bk; bv]
                pl.BlockSpec((G, G), lambda b, l: (0, 0)),           # Wc^T
                pl.BlockSpec((1, G), lambda b, l: (0, 0)),           # bc
            ],
            # NOTE on lane density: the output slab is only N*G*4 = 1 KiB per batch block and is
            # written once per L sweep under pl.when, so the 32-lane masked store is negligible;
            # flattening to a lane-dense (N*G,) slab would need an in-kernel sublane->lane
            # relayout that costs more XLU work than the masked vst it saves.
            out_specs=pl.BlockSpec((bt, N, G), lambda b, l: (b, 0, 0)),
            scratch_shapes=[pltpu.VMEM((bt, N, G), jnp.float32)],
        ),
        compiler_params=pltpu.CompilerParams(
            dimension_semantics=("parallel", "arbitrary"),   # batch -> megacore, L -> reduction
            vmem_limit_bytes=vmem_limit,
        ),
        cost_estimate=cost,
    )(input_graph, img_flat, wq_t, bq, wkv, bkv, wc_t, bc)


def _init_params(key, img_channel, graph_channel):
    """Deterministic Conv1d(k=1)-style init: U(-1/sqrt(fan_in), 1/sqrt(fan_in))."""
    ks = jax.random.split(key, 8)

    def u(k, shape, fan_in):
        bound = 1.0 / math.sqrt(fan_in)
        return jax.random.uniform(k, shape, jnp.float32, -bound, bound)

    G, C = graph_channel, img_channel
    return {
        "wq": u(ks[0], (G, 32), 32), "bq": u(ks[1], (G,), 32),
        "wk": u(ks[2], (G, C), C),   "bk": u(ks[3], (G,), C),
        "wv": u(ks[4], (G, C), C),   "bv": u(ks[5], (G,), C),
        "wc": u(ks[6], (G, G), G),   "bc": u(ks[7], (G,), G),
    }


def _reference(input_graph, input_image, p):
    """Pure-JAX replica of the torch forward, for a sanity check."""
    B, C, H, W = input_image.shape
    G = p["wq"].shape[0]
    x = input_image.reshape(B, C, H * W)                                   # (B, C, L)
    K = jnp.einsum("gc,bcl->bgl", p["wk"], x) + p["bk"][None, :, None]
    V = jnp.einsum("gc,bcl->bgl", p["wv"], x) + p["bv"][None, :, None]
    Q = jnp.einsum("gf,bnf->bng", p["wq"], input_graph) + p["bq"][None, None, :]
    att = jnp.einsum("bng,bgl->bnl", Q, K) / jnp.sqrt(jnp.float32(G))
    att = jax.nn.softmax(att, axis=1)                                      # over nodes
    msg = jnp.einsum("bgl,bnl->bgn", V, att)                               # (B, G, N)
    conv = jnp.einsum("og,bgn->bon", p["wc"], msg) + p["bc"][None, :, None]
    out = jnp.transpose(input_graph, (0, 2, 1)) + conv                     # (B, G, N)
    return jnp.transpose(out, (0, 2, 1))                                   # (B, N, G)


if __name__ == "__main__":
    B, N = 2, 8
    img_channel, graph_channel = 4, 32
    H = W = 16

    key = jax.random.PRNGKey(0)
    kg, ki, kp = jax.random.split(key, 3)
    input_graph = jax.random.normal(kg, (B, N, 32), jnp.float32)
    input_image = jax.random.normal(ki, (B, img_channel, H, W), jnp.float32)
    params = _init_params(kp, img_channel, graph_channel)

    ref = _reference(input_graph, input_image, params)

    # 1) one batch per step, two L tiles -> exercises the L-reduction accumulator path.
    out = jax.block_until_ready(connection_c2g(input_graph, input_image, params, bt=1, tl=128))
    assert out.shape == (B, N, graph_channel)
    assert jnp.allclose(out, ref, atol=1e-4, rtol=1e-4), "mismatch (bt=1, tl=128)"

    # 2) both batch elements in one grid step -> exercises the multi-batch block path.
    out = jax.block_until_ready(connection_c2g(input_graph, input_image, params, bt=2, tl=256))
    assert jnp.allclose(out, ref, atol=1e-4, rtol=1e-4), "mismatch (bt=2, tl=256)"

    # 3) bf16 image/weight stream for the MXU-heavy matmuls (v6e/v7x path), f32 accumulation.
    out = jax.block_until_ready(connection_c2g(input_graph, input_image, params, bt=2, tl=128,
                                               compute_dtype=jnp.bfloat16))
    assert jnp.allclose(out, ref, atol=1e-1, rtol=1e-1), "mismatch (bf16 compute)"

    print("KERNEL_OK")
</pallas_src>

<mosaic_0001>
module attributes {stable_mosaic.version = 11 : i64} {
  func.func @_c2g_kernel(%arg0: i32, %arg1: i32, %arg2: memref<1x8x32xf32, #tpu.memory_space<vmem>>, %arg3: memref<1x4x128xf32, #tpu.memory_space<vmem>>, %arg4: memref<32x32xf32, #tpu.memory_space<vmem>>, %arg5: memref<1x32xf32, #tpu.memory_space<vmem>>, %arg6: memref<64x4xf32, #tpu.memory_space<vmem>>, %arg7: memref<64x1xf32, #tpu.memory_space<vmem>>, %arg8: memref<32x32xf32, #tpu.memory_space<vmem>>, %arg9: memref<1x32xf32, #tpu.memory_space<vmem>>, %arg10: memref<1x8x32xf32, #tpu.memory_space<vmem>>, %arg11: memref<1x8x32xf32, #tpu.memory_space<vmem>>) attributes {dimension_semantics = [#tpu.dimension_semantics<parallel>, #tpu.dimension_semantics<arbitrary>], iteration_bounds = array<i64: 2, 2>, scalar_prefetch = 0 : i64, scratch_operands = 1 : i64, tpu.core_type = #tpu.core_type<tc>, window_params = [{transform_indices = @transform_0, window_bounds = array<i64: 1, 8, 32>}, {transform_indices = @transform_1, window_bounds = array<i64: 1, 4, 128>}, {pipeline_mode = #tpu.pipeline_mode<synchronous>, transform_indices = @transform_2, window_bounds = array<i64: 32, 32>}, {pipeline_mode = #tpu.pipeline_mode<synchronous>, transform_indices = @transform_3, window_bounds = array<i64: 1, 32>}, {pipeline_mode = #tpu.pipeline_mode<synchronous>, transform_indices = @transform_4, window_bounds = array<i64: 64, 4>}, {pipeline_mode = #tpu.pipeline_mode<synchronous>, transform_indices = @transform_5, window_bounds = array<i64: 64, 1>}, {pipeline_mode = #tpu.pipeline_mode<synchronous>, transform_indices = @transform_6, window_bounds = array<i64: 32, 32>}, {pipeline_mode = #tpu.pipeline_mode<synchronous>, transform_indices = @transform_7, window_bounds = array<i64: 1, 32>}, {transform_indices = @transform_8, window_bounds = array<i64: 1, 8, 32>}]} {
    %c0_i32 = arith.constant 0 : i32
    %0 = arith.cmpi eq, %arg1, %c0_i32 : i32
    %1 = arith.extui %0 : i1 to i32
    %c0_i32_0 = arith.constant 0 : i32
    %2 = arith.cmpi ne, %1, %c0_i32_0 : i32
    scf.if %2 {
      %cst_27 = arith.constant 0.000000e+00 : f32
      %42 = vector.broadcast %cst_27 : f32 to vector<1x8x32xf32>
      %c0_28 = arith.constant 0 : index
      %c0_29 = arith.constant 0 : index
      %c0_30 = arith.constant 0 : index
      %43 = vector.load %arg11[%c0_28, %c0_29, %c0_30] : memref<1x8x32xf32, #tpu.memory_space<vmem>>, vector<1x8x32xf32>
      tpu.vector_store %arg11[%c0_28, %c0_29, %c0_30], %42 {strides = array<i32>} : memref<1x8x32xf32, #tpu.memory_space<vmem>>, vector<1x8x32xf32>,
    } else {
    }
    %c0 = arith.constant 0 : index
    %c0_1 = arith.constant 0 : index
    %3 = vector.load %arg6[%c0, %c0_1] : memref<64x4xf32, #tpu.memory_space<vmem>>, vector<64x4xf32>
    %c0_2 = arith.constant 0 : index
    %c0_3 = arith.constant 0 : index
    %4 = vector.load %arg7[%c0_2, %c0_3] : memref<64x1xf32, #tpu.memory_space<vmem>>, vector<64x1xf32>
    %c0_4 = arith.constant 0 : index
    %c0_5 = arith.constant 0 : index
    %5 = vector.load %arg4[%c0_4, %c0_5] : memref<32x32xf32, #tpu.memory_space<vmem>>, vector<32x32xf32>
    %c0_6 = arith.constant 0 : index
    %c0_7 = arith.constant 0 : index
    %6 = vector.load %arg5[%c0_6, %c0_7] : memref<1x32xf32, #tpu.memory_space<vmem>>, vector<1x32xf32>
    %c0_8 = arith.constant 0 : index
    %c0_9 = arith.constant 0 : index
    %c0_10 = arith.constant 0 : index
    %7 = vector.load %arg3[%c0_8, %c0_9, %c0_10] : memref<1x4x128xf32, #tpu.memory_space<vmem>>, vector<1x4x128xf32>
    %8 = vector.shape_cast %7 : vector<1x4x128xf32> to vector<4x128xf32>
    %c0_11 = arith.constant 0 : index
    %c0_12 = arith.constant 0 : index
    %c0_13 = arith.constant 0 : index
    %9 = vector.load %arg2[%c0_11, %c0_12, %c0_13] : memref<1x8x32xf32, #tpu.memory_space<vmem>>, vector<1x8x32xf32>
    %10 = vector.shape_cast %9 : vector<1x8x32xf32> to vector<8x32xf32>
    %cst = arith.constant dense<0.000000e+00> : vector<64x128xf32>
    %11 = tpu.matmul %3, %8, %cst {dimension_numbers = #tpu.dot_dimension_numbers<[1], [0], [0], [1], [0, 0, 1, 1], [], []>} : vector<64x4xf32>, vector<4x128xf32>, vector<64x128xf32> -> vector<64x128xf32>
    %12 = vector.broadcast %4 : vector<64x1xf32> to vector<64x128xf32>
    %13 = arith.addf %11, %12 : vector<64x128xf32>
    %14 = vector.extract_strided_slice %13 {offsets = [0, 0], sizes = [32, 128], strides = [1, 1]} : vector<64x128xf32> to vector<32x128xf32>
    %15 = vector.extract_strided_slice %13 {offsets = [32, 0], sizes = [32, 128], strides = [1, 1]} : vector<64x128xf32> to vector<32x128xf32>
    %cst_14 = arith.constant dense<0.000000e+00> : vector<8x32xf32>
    %16 = tpu.matmul %10, %5, %cst_14 {dimension_numbers = #tpu.dot_dimension_numbers<[1], [0], [0], [1], [0, 0, 1, 1], [], []>} : vector<8x32xf32>, vector<32x32xf32>, vector<8x32xf32> -> vector<8x32xf32>
    %17 = vector.broadcast %6 : vector<1x32xf32> to vector<8x32xf32>
    %18 = arith.addf %16, %17 : vector<8x32xf32>
    %cst_15 = arith.constant dense<0.000000e+00> : vector<8x128xf32>
    %19 = tpu.matmul %18, %14, %cst_15 {dimension_numbers = #tpu.dot_dimension_numbers<[1], [0], [0], [1], [0, 0, 1, 1], [], []>} : vector<8x32xf32>, vector<32x128xf32>, vector<8x128xf32> -> vector<8x128xf32>
    %cst_16 = arith.constant 0.176776692 : f32
    %20 = vector.broadcast %cst_16 : f32 to vector<8x128xf32>
    %21 = arith.mulf %19, %20 : vector<8x128xf32>
    %cst_17 = arith.constant dense<0xFF800000> : vector<128xf32>
    %22 = vector.multi_reduction <maximumf>, %21, %cst_17 [0] : vector<8x128xf32> to vector<128xf32>
    %23 = vector.shape_cast %22 : vector<128xf32> to vector<1x128xf32>
    %24 = vector.broadcast %23 : vector<1x128xf32> to vector<8x128xf32>
    %25 = arith.subf %21, %24 : vector<8x128xf32>
    %26 = math.exp %25 : vector<8x128xf32>
    %cst_18 = arith.constant dense<0.000000e+00> : vector<128xf32>
    %27 = vector.multi_reduction <add>, %26, %cst_18 [0] : vector<8x128xf32> to vector<128xf32>
    %28 = vector.shape_cast %27 : vector<128xf32> to vector<1x128xf32>
    %29 = tpu.reciprocal %28 : vector<1x128xf32> -> vector<1x128xf32>
    %30 = vector.broadcast %29 : vector<1x128xf32> to vector<8x128xf32>
    %31 = arith.mulf %26, %30 : vector<8x128xf32>
    %c0_19 = arith.constant 0 : index
    %c0_20 = arith.constant 0 : index
    %c0_21 = arith.constant 0 : index
    %32 = vector.load %arg11[%c0_19, %c0_20, %c0_21] : memref<1x8x32xf32, #tpu.memory_space<vmem>>, vector<1x8x32xf32>
    %33 = vector.shape_cast %32 : vector<1x8x32xf32> to vector<8x32xf32>
    %cst_22 = arith.constant dense<0.000000e+00> : vector<8x32xf32>
    %34 = tpu.matmul %31, %15, %cst_22 {dimension_numbers = #tpu.dot_dimension_numbers<[1], [1], [0], [0], [0, 0, 1, 0], [], []>} : vector<8x128xf32>, vector<32x128xf32>, vector<8x32xf32> -> vector<8x32xf32>
    %35 = arith.addf %33, %34 : vector<8x32xf32>
    %c0_23 = arith.constant 0 : index
    %c0_24 = arith.constant 0 : index
    %c0_25 = arith.constant 0 : index
    %36 = vector.load %arg11[%c0_23, %c0_24, %c0_25] : memref<1x8x32xf32, #tpu.memory_space<vmem>>, vector<1x8x32xf32>
    %37 = vector.shape_cast %36 : vector<1x8x32xf32> to vector<8x32xf32>
    %38 = vector.shape_cast %35 : vector<8x32xf32> to vector<1x8x32xf32>
    tpu.vector_store %arg11[%c0_23, %c0_24, %c0_25], %38 {strides = array<i32>} : memref<1x8x32xf32, #tpu.memory_space<vmem>>, vector<1x8x32xf32>,
    %c1_i32 = arith.constant 1 : i32
    %39 = arith.cmpi eq, %arg1, %c1_i32 : i32
    %40 = arith.extui %39 : i1 to i32
    %c0_i32_26 = arith.constant 0 : i32
    %41 = arith.cmpi ne, %40, %c0_i32_26 : i32
    scf.if %41 {
      %c0_27 = arith.constant 0 : index
      %c0_28 = arith.constant 0 : index
      %42 = vector.load %arg8[%c0_27, %c0_28] : memref<32x32xf32, #tpu.memory_space<vmem>>, vector<32x32xf32>
      %c0_29 = arith.constant 0 : index
      %c0_30 = arith.constant 0 : index
      %43 = vector.load %arg9[%c0_29, %c0_30] : memref<1x32xf32, #tpu.memory_space<vmem>>, vector<1x32xf32>
      %c0_31 = arith.constant 0 : index
      %c0_32 = arith.constant 0 : index
      %c0_33 = arith.constant 0 : index
      %44 = vector.load %arg11[%c0_31, %c0_32, %c0_33] : memref<1x8x32xf32, #tpu.memory_space<vmem>>, vector<1x8x32xf32>
      %45 = vector.shape_cast %44 : vector<1x8x32xf32> to vector<8x32xf32>
      %cst_34 = arith.constant dense<0.000000e+00> : vector<8x32xf32>
      %46 = tpu.matmul %45, %42, %cst_34 {dimension_numbers = #tpu.dot_dimension_numbers<[1], [0], [0], [1], [0, 0, 1, 1], [], []>} : vector<8x32xf32>, vector<32x32xf32>, vector<8x32xf32> -> vector<8x32xf32>
      %47 = vector.broadcast %43 : vector<1x32xf32> to vector<8x32xf32>
      %48 = arith.addf %46, %47 : vector<8x32xf32>
      %c0_35 = arith.constant 0 : index
      %c0_36 = arith.constant 0 : index
      %c0_37 = arith.constant 0 : index
      %49 = vector.load %arg2[%c0_35, %c0_36, %c0_37] : memref<1x8x32xf32, #tpu.memory_space<vmem>>, vector<1x8x32xf32>
      %50 = vector.shape_cast %49 : vector<1x8x32xf32> to vector<8x32xf32>
      %51 = arith.addf %50, %48 : vector<8x32xf32>
      %c0_38 = arith.constant 0 : index
      %c0_39 = arith.constant 0 : index
      %c0_40 = arith.constant 0 : index
      %52 = vector.load %arg10[%c0_38, %c0_39, %c0_40] : memref<1x8x32xf32, #tpu.memory_space<vmem>>, vector<1x8x32xf32>
      %53 = vector.shape_cast %52 : vector<1x8x32xf32> to vector<8x32xf32>
      %54 = vector.shape_cast %51 : vector<8x32xf32> to vector<1x8x32xf32>
      tpu.vector_store %arg10[%c0_38, %c0_39, %c0_40], %54 {strides = array<i32>} : memref<1x8x32xf32, #tpu.memory_space<vmem>>, vector<1x8x32xf32>,
    } else {
    }
    return
  }
  func.func @transform_0(%arg0: i32, %arg1: i32) -> (i32, i32, i32) {
    %c0_i32 = arith.constant 0 : i32
    %c0_i32_0 = arith.constant 0 : i32
    %c0_i32_1 = arith.constant 0 : i32
    return %arg0, %c0_i32, %c0_i32_0 : i32, i32, i32
  }
  func.func @transform_1(%arg0: i32, %arg1: i32) -> (i32, i32, i32) {
    %c0_i32 = arith.constant 0 : i32
    %c0_i32_0 = arith.constant 0 : i32
    return %arg0, %c0_i32, %arg1 : i32, i32, i32
  }
  func.func @transform_2(%arg0: i32, %arg1: i32) -> (i32, i32) {
    %c0_i32 = arith.constant 0 : i32
    %c0_i32_0 = arith.constant 0 : i32
    %c0_i32_1 = arith.constant 0 : i32
    return %c0_i32, %c0_i32_0 : i32, i32
  }
  func.func @transform_3(%arg0: i32, %arg1: i32) -> (i32, i32) {
    %c0_i32 = arith.constant 0 : i32
    %c0_i32_0 = arith.constant 0 : i32
    %c0_i32_1 = arith.constant 0 : i32
    return %c0_i32, %c0_i32_0 : i32, i32
  }
  func.func @transform_4(%arg0: i32, %arg1: i32) -> (i32, i32) {
    %c0_i32 = arith.constant 0 : i32
    %c0_i32_0 = arith.constant 0 : i32
    %c0_i32_1 = arith.constant 0 : i32
    return %c0_i32, %c0_i32_0 : i32, i32
  }
  func.func @transform_5(%arg0: i32, %arg1: i32) -> (i32, i32) {
    %c0_i32 = arith.constant 0 : i32
    %c0_i32_0 = arith.constant 0 : i32
    %c0_i32_1 = arith.constant 0 : i32
    return %c0_i32, %c0_i32_0 : i32, i32
  }
  func.func @transform_6(%arg0: i32, %arg1: i32) -> (i32, i32) {
    %c0_i32 = arith.constant 0 : i32
    %c0_i32_0 = arith.constant 0 : i32
    %c0_i32_1 = arith.constant 0 : i32
    return %c0_i32, %c0_i32_0 : i32, i32
  }
  func.func @transform_7(%arg0: i32, %arg1: i32) -> (i32, i32) {
    %c0_i32 = arith.constant 0 : i32
    %c0_i32_0 = arith.constant 0 : i32
    %c0_i32_1 = arith.constant 0 : i32
    return %c0_i32, %c0_i32_0 : i32, i32
  }
  func.func @transform_8(%arg0: i32, %arg1: i32) -> (i32, i32, i32) {
    %c0_i32 = arith.constant 0 : i32
    %c0_i32_0 = arith.constant 0 : i32
    %c0_i32_1 = arith.constant 0 : i32
    return %arg0, %c0_i32, %c0_i32_0 : i32, i32, i32
  }
}

</mosaic_0001>

<llo_original>
// kernel: tpu_custom_call.1
$region0: #{tpu_custom_call.1}
  #allocation0 [shape = 'u32[]', space=smem, size = 0x4, offset = 0x4, fixed_abs, tag = 'smem constant byte address 0x4 - core index']
  #allocation1 [shape = 'u32[144,128]{1,0:T(1,128)}', space=vmem, size = 0x12000, scoped, tag = 'internal scratch']
  #allocation2 [shape = 'f32[1,8,32]{2,1,0:T(8,128)}', space=vmem, size = 0x1000, scoped, tag = 'scratch operand']
  %s0 = inlined_call_operand.vmem [shape: f32[2,8,32], index: 0, kind: input, shape index: {}]
  %s1 = inlined_call_operand.vmem [shape: f32[2,4,256], index: 1, kind: input, shape index: {}]
  %s2 = inlined_call_operand.vmem [shape: f32[32,32], index: 2, kind: input, shape index: {}]
  %s3 = inlined_call_operand.vmem [shape: f32[1,32], index: 3, kind: input, shape index: {}]
  %s4 = inlined_call_operand.vmem [shape: f32[64,4], index: 4, kind: input, shape index: {}]
  %s5 = inlined_call_operand.vmem [shape: f32[64,1], index: 5, kind: input, shape index: {}]
  %s6 = inlined_call_operand.vmem [shape: f32[32,32], index: 6, kind: input, shape index: {}]
  %s7 = inlined_call_operand.vmem [shape: f32[1,32], index: 7, kind: input, shape index: {}]
  %s8 = inlined_call_operand.hbm [shape: f32[2,8,32], index: 8, kind: output, shape index: {}]
  %s9 = sld [smem:[#allocation0]]
  $region73: #{tpu_custom_call.1} parent=0
    _
  %s11 = ssub.s32 1, %s9
  %s12 = scalar_select 0, %s11, %s9
  $region1: #{tpu_custom_call.1} parent=0
    #allocation3 [shape = 'u8[8192]{0}', space=vmem, size = 0x2000, scoped, tag = 'output window, operand 0']
    #allocation4 [shape = 's32[2]{0}', space=sflag, size = 0x8, scoped, tag = 'scoped memory for tpu_custom_call.1']
    %13 = vsyncpa [#allocation4], 0
    %s14 = scalar_lea.sflag [#allocation4], 1
    %15 = vsyncpa %s14, 0
    loop: start=0, step=1, limit=6
    $region2: #{tpu_custom_call.1} parent=1 // loop_pre_header
      _
    $region3: #{tpu_custom_call.1} parent=1 // loop_header
      %s17 = sphi 0, %s21
      %p18 = scmp.ge.s32.totalorder %s17, 6
      %s24 = sphi 0, %s36
      %s25 = sphi 0, %s32
      %s26 = sphi 0, %s24
      %s27 = sphi 0, %s25
      %s28 = sphi 0, %s26
      %s29 = sphi 0, %s27
      %s39 = sphi 0, %s41
      %s42 = sphi 0, %s39
      %s43 = sphi 0, %s42
      %s59 = sphi 0, %s43
      %s67 = sphi 0, %s69
      %s70 = sphi 0, %s67
      %s71 = sphi 0, %s70
      %s87 = sphi 0, %s71
      %s91 = sphi 0, %s91
      %s93 = sphi 0, %s91
      %s94 = sphi 0, %s93
      %s108 = sphi 0, %s94
      %s112 = sphi 0, %s112
      %s114 = sphi 0, %s112
      %s115 = sphi 0, %s114
      %s129 = sphi 0, %s115
      %s133 = sphi 0, %s133
      %s135 = sphi 0, %s133
      %s136 = sphi 0, %s135
      %s150 = sphi 0, %s136
      %s154 = sphi 0, %s154
      %s156 = sphi 0, %s154
      %s157 = sphi 0, %s156
      %s171 = sphi 0, %s157
      %s175 = sphi 0, %s175
      %s177 = sphi 0, %s175
      %s178 = sphi 0, %s177
      %s192 = sphi 0, %s178
      %s196 = sphi 0, %s196
      %s198 = sphi 0, %s196
      %s199 = sphi 0, %s198
      %s213 = sphi 0, %s199
      %s219 = sphi 0, %s221
      %s222 = sphi 0, %s219
      %s223 = sphi 0, %s222
      %s239 = sphi 0, %s223
    $region4: #{tpu_custom_call.1} parent=1 // loop_header_branch
      %20 = sbr.rel (%p18) target = $region8
    $region5: #{tpu_custom_call.1} parent=1 // loop_body
      %s22 = ssub.s32 %s17, 1
      %s23 = ssub.s32 %s17, 2
      %s30 = sadd.s32 1, %s25
      %p31 = scmp.ge.s32.totalorder %s30, 2
      %s32 = scalar_select %p31, 0, %s30
      %s33 = sadd.s32 1, %s24
      %s34 = scalar_select %p31, %s33, %s24
      %p35 = scmp.ge.s32.totalorder %s34, 2
      %s36 = scalar_select %p35, 0, %s34
      %s37 = ssub.s32 %s24, %s36
      %p38 = scmp.eq.s32.totalorder %s37, 0
      %s40 = sadd.s32 %s39, 1
      %s41 = scalar_select %p38, %s39, %s40
      %p44 = pneg %p38
      %p45 = scmp.eq.s32.totalorder %s17, 3
      %p46 = por %p44, %p45
      %p47 = scmp.ne.s32.totalorder %s39, %s42
      %p48 = scmp.eq.s32.totalorder %s17, 0
      %p49 = por %p47, %p48
      %p50 = scmp.ne.s32.totalorder %s39, %s42
      %p51 = scmp.eq.s32.totalorder %s22, 3
      %p52 = por %p50, %p51
      %p53 = scmp.ne.s32.totalorder %s42, %s43
      %p54 = scmp.eq.s32.totalorder %s22, 0
      %p55 = por %p53, %p54
      %p56 = scmp.ne.s32.totalorder %s42, %s43
      %p57 = scmp.eq.s32.totalorder %s23, 3
      %p58 = por %p56, %p57
      %p60 = scmp.ne.s32.totalorder %s43, %s59
      %p61 = scmp.eq.s32.totalorder %s23, 0
      %p62 = por %p60, %p61
      %s63 = ssub.s32 %s24, %s36
      %s64 = ssub.s32 %s25, %s32
      %s65 = sor.u32 %s63, %s64
      %p66 = scmp.eq.s32.totalorder %s65, 0
      %s68 = sadd.s32 %s67, 1
      %s69 = scalar_select %p66, %s67, %s68
      %p72 = pneg %p66
      %p73 = scmp.eq.s32.totalorder %s17, 3
      %p74 = por %p72, %p73
      %p75 = scmp.ne.s32.totalorder %s67, %s70
      %p76 = scmp.eq.s32.totalorder %s17, 0
      %p77 = por %p75, %p76
      %p78 = scmp.ne.s32.totalorder %s67, %s70
      %p79 = scmp.eq.s32.totalorder %s22, 3
      %p80 = por %p78, %p79
      %p81 = scmp.ne.s32.totalorder %s70, %s71
      %p82 = scmp.eq.s32.totalorder %s22, 0
      %p83 = por %p81, %p82
      %p84 = scmp.ne.s32.totalorder %s70, %s71
      %p85 = scmp.eq.s32.totalorder %s23, 3
      %p86 = por %p84, %p85
      %p88 = scmp.ne.s32.totalorder %s71, %s87
      %p89 = scmp.eq.s32.totalorder %s23, 0
      %p90 = por %p88, %p89
      %s92 = sadd.s32 %s91, 1
      %p95 = scmp.eq.s32.totalorder %s17, 3
      %p96 = scmp.ne.s32.totalorder %s91, %s93
      %p97 = scmp.eq.s32.totalorder %s17, 0
      %p98 = por %p96, %p97
      %p99 = scmp.ne.s32.totalorder %s91, %s93
      %p100 = scmp.eq.s32.totalorder %s22, 3
      %p101 = por %p99, %p100
      %p102 = scmp.ne.s32.totalorder %s93, %s94
      %p103 = scmp.eq.s32.totalorder %s22, 0
      %p104 = por %p102, %p103
      %p105 = scmp.ne.s32.totalorder %s93, %s94
      %p106 = scmp.eq.s32.totalorder %s23, 3
      %p107 = por %p105, %p106
      %p109 = scmp.ne.s32.totalorder %s94, %s108
      %p110 = scmp.eq.s32.totalorder %s23, 0
      %p111 = por %p109, %p110
      %s113 = sadd.s32 %s112, 1
      %p116 = scmp.eq.s32.totalorder %s17, 3
      %p117 = scmp.ne.s32.totalorder %s112, %s114
      %p118 = scmp.eq.s32.totalorder %s17, 0
      %p119 = por %p117, %p118
      %p120 = scmp.ne.s32.totalorder %s112, %s114
      %p121 = scmp.eq.s32.totalorder %s22, 3
      %p122 = por %p120, %p121
      %p123 = scmp.ne.s32.totalorder %s114, %s115
      %p124 = scmp.eq.s32.totalorder %s22, 0
      %p125 = por %p123, %p124
      %p126 = scmp.ne.s32.totalorder %s114, %s115
      %p127 = scmp.eq.s32.totalorder %s23, 3
      %p128 = por %p126, %p127
      %p130 = scmp.ne.s32.totalorder %s115, %s129
      %p131 = scmp.eq.s32.totalorder %s23, 0
      %p132 = por %p130, %p131
      %s134 = sadd.s32 %s133, 1
      %p137 = scmp.eq.s32.totalorder %s17, 3
      %p138 = scmp.ne.s32.totalorder %s133, %s135
      %p139 = scmp.eq.s32.totalorder %s17, 0
      %p140 = por %p138, %p139
      %p141 = scmp.ne.s32.totalorder %s133, %s135
      %p142 = scmp.eq.s32.totalorder %s22, 3
      %p143 = por %p141, %p142
      %p144 = scmp.ne.s32.totalorder %s135, %s136
      %p145 = scmp.eq.s32.totalorder %s22, 0
      %p146 = por %p144, %p145
      %p147 = scmp.ne.s32.totalorder %s135, %s136
      %p148 = scmp.eq.s32.totalorder %s23, 3
      %p149 = por %p147, %p148
      %p151 = scmp.ne.s32.totalorder %s136, %s150
      %p152 = scmp.eq.s32.totalorder %s23, 0
      %p153 = por %p151, %p152
      %s155 = sadd.s32 %s154, 1
      %p158 = scmp.eq.s32.totalorder %s17, 3
      %p159 = scmp.ne.s32.totalorder %s154, %s156
      %p160 = scmp.eq.s32.totalorder %s17, 0
      %p161 = por %p159, %p160
      %p162 = scmp.ne.s32.totalorder %s154, %s156
      %p163 = scmp.eq.s32.totalorder %s22, 3
      %p164 = por %p162, %p163
      %p165 = scmp.ne.s32.totalorder %s156, %s157
      %p166 = scmp.eq.s32.totalorder %s22, 0
      %p167 = por %p165, %p166
      %p168 = scmp.ne.s32.totalorder %s156, %s157
      %p169 = scmp.eq.s32.totalorder %s23, 3
      %p170 = por %p168, %p169
      %p172 = scmp.ne.s32.totalorder %s157, %s171
      %p173 = scmp.eq.s32.totalorder %s23, 0
      %p174 = por %p172, %p173
      %s176 = sadd.s32 %s175, 1
      %p179 = scmp.eq.s32.totalorder %s17, 3
      %p180 = scmp.ne.s32.totalorder %s175, %s177
      %p181 = scmp.eq.s32.totalorder %s17, 0
      %p182 = por %p180, %p181
      %p183 = scmp.ne.s32.totalorder %s175, %s177
      %p184 = scmp.eq.s32.totalorder %s22, 3
      %p185 = por %p183, %p184
      %p186 = scmp.ne.s32.totalorder %s177, %s178
      %p187 = scmp.eq.s32.totalorder %s22, 0
      %p188 = por %p186, %p187
      %p189 = scmp.ne.s32.totalorder %s177, %s178
      %p190 = scmp.eq.s32.totalorder %s23, 3
      %p191 = por %p189, %p190
      %p193 = scmp.ne.s32.totalorder %s178, %s192
      %p194 = scmp.eq.s32.totalorder %s23, 0
      %p195 = por %p193, %p194
      %s197 = sadd.s32 %s196, 1
      %p200 = scmp.eq.s32.totalorder %s17, 3
      %p201 = scmp.ne.s32.totalorder %s196, %s198
      %p202 = scmp.eq.s32.totalorder %s17, 0
      %p203 = por %p201, %p202
      %p204 = scmp.ne.s32.totalorder %s196, %s198
      %p205 = scmp.eq.s32.totalorder %s22, 3
      %p206 = por %p204, %p205
      %p207 = scmp.ne.s32.totalorder %s198, %s199
      %p208 = scmp.eq.s32.totalorder %s22, 0
      %p209 = por %p207, %p208
      %p210 = scmp.ne.s32.totalorder %s198, %s199
      %p211 = scmp.eq.s32.totalorder %s23, 3
      %p212 = por %p210, %p211
      %p214 = scmp.ne.s32.totalorder %s199, %s213
      %p215 = scmp.eq.s32.totalorder %s23, 0
      %p216 = por %p214, %p215
      %s217 = ssub.s32 %s24, %s36
      %p218 = scmp.eq.s32.totalorder %s217, 0
      %s220 = sadd.s32 %s219, 1
      %s221 = scalar_select %p218, %s219, %s220
      %p224 = pneg %p218
      %p225 = scmp.eq.s32.totalorder %s17, 3
      %p226 = por %p224, %p225
      %p227 = scmp.ne.s32.totalorder %s219, %s222
      %p228 = scmp.eq.s32.totalorder %s17, 0
      %p229 = por %p227, %p228
      %p230 = scmp.ne.s32.totalorder %s219, %s222
      %p231 = scmp.eq.s32.totalorder %s22, 3
      %p232 = por %p230, %p231
      %p233 = scmp.ne.s32.totalorder %s222, %s223
      %p234 = scmp.eq.s32.totalorder %s22, 0
      %p235 = por %p233, %p234
      %p236 = scmp.ne.s32.totalorder %s222, %s223
      %p237 = scmp.eq.s32.totalorder %s23, 3
      %p238 = por %p236, %p237
      %p240 = scmp.ne.s32.totalorder %s223, %s239
      %p241 = scmp.eq.s32.totalorder %s23, 0
      %p242 = por %p240, %p241
      %p243 = scmp.le.s32.totalorder 1, %s17
      %p244 = scmp.lt.s32.totalorder %s17, 5
      %p245 = pnand %p243, %p244
      %p246 = pneg %p245
      // Predicated region
      $region9: #{tpu_custom_call.1} parent=5 // pred_check
        _
      $region10: #{tpu_custom_call.1} parent=5 // pred_check_branch
        %248 = sbr.rel (%p245) target = $region12
      $region11: #{tpu_custom_call.1} parent=5 // pred_region
        %s249 = ssub.s32 %s17, 1
        // Predicated region
        $region13: #{tpu_custom_call.1} parent=11 // pred_check
          %p250 = pneg %p104
        $region14: #{tpu_custom_call.1} parent=11 // pred_check_branch
          %252 = sbr.rel (%p250) target = $region16
        $region15: #{tpu_custom_call.1} parent=11 // pred_region
          _
        $region16: #{tpu_custom_call.1} parent=11 // pred_fallthru
          _
        // Predicated region
        $region17: #{tpu_custom_call.1} parent=11 // pred_check
          %p253 = pneg %p125
        $region18: #{tpu_custom_call.1} parent=11 // pred_check_branch
          %255 = sbr.rel (%p253) target = $region20
        $region19: #{tpu_custom_call.1} parent=11 // pred_region
          _
        $region20: #{tpu_custom_call.1} parent=11 // pred_fallthru
          _
        // Predicated region
        $region21: #{tpu_custom_call.1} parent=11 // pred_check
          %p256 = pneg %p146
        $region22: #{tpu_custom_call.1} parent=11 // pred_check_branch
          %258 = sbr.rel (%p256) target = $region24
        $region23: #{tpu_custom_call.1} parent=11 // pred_region
          _
        $region24: #{tpu_custom_call.1} parent=11 // pred_fallthru
          _
        // Predicated region
        $region25: #{tpu_custom_call.1} parent=11 // pred_check
          %p259 = pneg %p167
        $region26: #{tpu_custom_call.1} parent=11 // pred_check_branch
          %261 = sbr.rel (%p259) target = $region28
        $region27: #{tpu_custom_call.1} parent=11 // pred_region
          _
        $region28: #{tpu_custom_call.1} parent=11 // pred_fallthru
          _
        // Predicated region
        $region29: #{tpu_custom_call.1} parent=11 // pred_check
          %p262 = pneg %p188
        $region30: #{tpu_custom_call.1} parent=11 // pred_check_branch
          %264 = sbr.rel (%p262) target = $region32
        $region31: #{tpu_custom_call.1} parent=11 // pred_region
          _
        $region32: #{tpu_custom_call.1} parent=11 // pred_fallthru
          _
        // Predicated region
        $region33: #{tpu_custom_call.1} parent=11 // pred_check
          %p265 = pneg %p209
        $region34: #{tpu_custom_call.1} parent=11 // pred_check_branch
          %267 = sbr.rel (%p265) target = $region36
        $region35: #{tpu_custom_call.1} parent=11 // pred_region
          _
        $region36: #{tpu_custom_call.1} parent=11 // pred_fallthru
          _
      $region12: #{tpu_custom_call.1} parent=5 // pred_fallthru
        _
      %p268 = scmp.lt.s32.totalorder %s17, 4
      // Predicated region
      $region37: #{tpu_custom_call.1} parent=5 // pred_check
        %p269 = pneg %p268
      $region38: #{tpu_custom_call.1} parent=5 // pred_check_branch
        %271 = sbr.rel (%p269) target = $region40
      $region39: #{tpu_custom_call.1} parent=5 // pred_region
        // Predicated region
        $region41: #{tpu_custom_call.1} parent=39 // pred_check
          %p272 = pneg %p49
        $region42: #{tpu_custom_call.1} parent=39 // pred_check_branch
          %274 = sbr.rel (%p272) target = $region44
        $region43: #{tpu_custom_call.1} parent=39 // pred_region
          %p275 = scmp.lt.s32.totalorder %s24, 1
          %s276 = scalar_select %p275, %s24, 1
          %s277 = smul.addr %s276, 8
          %s278 = scalar_lea.vmem %s0, %s277
        $region44: #{tpu_custom_call.1} parent=39 // pred_fallthru
          _
        // Predicated region
        $region45: #{tpu_custom_call.1} parent=39 // pred_check
          %p279 = pneg %p77
        $region46: #{tpu_custom_call.1} parent=39 // pred_check_branch
          %281 = sbr.rel (%p279) target = $region48
        $region47: #{tpu_custom_call.1} parent=39 // pred_region
          %p282 = scmp.lt.s32.totalorder %s24, 1
          %s283 = scalar_select %p282, %s24, 1
          %p284 = scmp.lt.s32.totalorder %s25, 1
          %s285 = scalar_select %p284, %s25, 1
          %s286 = smul.addr %s283, 2
          %s287 = sadd.s32 %s285, %s286
          %s288 = smul.addr %s287, 4
          %s289 = scalar_lea.vmem %s1, %s288
        $region48: #{tpu_custom_call.1} parent=39 // pred_fallthru
          _
      $region40: #{tpu_custom_call.1} parent=5 // pred_fallthru
        _
      %p290 = scmp.le.s32.totalorder 1, %s17
      %p291 = scmp.lt.s32.totalorder %s17, 5
      %p292 = pnand %p290, %p291
      %p293 = pneg %p292
      // Predicated region
      $region49: #{tpu_custom_call.1} parent=5 // pred_check
        _
      $region50: #{tpu_custom_call.1} parent=5 // pred_check_branch
        %295 = sbr.rel (%p292) target = $region52
      $region51: #{tpu_custom_call.1} parent=5 // pred_region
        %s296 = ssub.s32 %s17, 1
        %p297 = scmp.lt.s32.totalorder %s26, 1
        %s298 = scalar_select %p297, %s26, 1
        %s299 = smul.addr %s298, 8
        %s300 = scalar_lea.vmem %s0, %s299
        %p301 = pneg %p55
        %p302 = pneg %p52
        %p303 = scmp.lt.s32.totalorder %s26, 1
        %s304 = scalar_select %p303, %s26, 1
        %p305 = scmp.lt.s32.totalorder %s27, 1
        %s306 = scalar_select %p305, %s27, 1
        %s307 = smul.addr %s304, 2
        %s308 = sadd.s32 %s306, %s307
        %s309 = smul.addr %s308, 4
        %s310 = scalar_lea.vmem %s1, %s309
        %p311 = pneg %p83
        %p312 = pneg %p80
        %p313 = pneg %p104
        %p314 = pneg %p101
        %p315 = pneg %p125
        %p316 = pneg %p122
        %p317 = pneg %p146
        %p318 = pneg %p143
        %p319 = pneg %p167
        %p320 = pneg %p164
        %p321 = pneg %p188
        %p322 = pneg %p185
        %p323 = pneg %p209
        %p324 = pneg %p206
        %p325 = pneg %p235
        %p326 = pneg %p232
        %s327 = sand.u32 %s222, 1
        %s328 = scalar_lea.sflag [#allocation4], %s327
        %s329 = sand.u32 %s222, 1
        %s330 = smul.addr %s329, 8
        %s331 = scalar_lea.vmem [#allocation3], %s330
        %p332 = scmp.lt.s32.totalorder %s26, 1
        %s333 = scalar_select %p332, %s26, 1
        %s334 = smul.addr %s333, 8
        %s335 = scalar_lea.vmem %s0, %s334
        %p336 = scmp.lt.s32.totalorder %s26, 1
        %s337 = scalar_select %p336, %s26, 1
        %p338 = scmp.lt.s32.totalorder %s27, 1
        %s339 = scalar_select %p338, %s27, 1
        %s340 = smul.addr %s337, 2
        %s341 = sadd.s32 %s339, %s340
        %s342 = smul.addr %s341, 4
        %s343 = scalar_lea.vmem %s1, %s342
        %p344 = scmp.eq.s32.totalorder %s27, 0
        // Predicated region
        $region53: #{tpu_custom_call.1} parent=51 // pred_check
          %p345 = pneg %p344
        $region54: #{tpu_custom_call.1} parent=51 // pred_check_branch
          %347 = sbr.rel (%p345) target = $region56
        $region55: #{tpu_custom_call.1} parent=51 // pred_region
          %vm348 = vcmask 261120
          %349 = vst.msk [vmem:[#allocation2] sm:$0xff] %vm348, 0.0
        $region56: #{tpu_custom_call.1} parent=51 // pred_fallthru
          _
        %v350 = vld [vmem:[%s4] sm:$0xff]
        %v351 = vld [vmem:[%s4 + $0x8] sm:$0xff]
        %v352 = vld [vmem:[%s4 + $0x10] sm:$0xff]
        %v353 = vld [vmem:[%s4 + $0x18] sm:$0xff]
        %v354 = vld [vmem:[%s4 + $0x20] sm:$0xff]
        %v355 = vld [vmem:[%s4 + $0x28] sm:$0xff]
        %v356 = vld [vmem:[%s4 + $0x30] sm:$0xff]
        %v357 = vld [vmem:[%s4 + $0x38] sm:$0xff]
        %v358 = vld [vmem:[%s5] sm:$0xff]
        %v359 = vld [vmem:[%s5 + $0x8] sm:$0xff]
        %v360 = vld [vmem:[%s5 + $0x10] sm:$0xff]
        %v361 = vld [vmem:[%s5 + $0x18] sm:$0xff]
        %v362 = vld [vmem:[%s5 + $0x20] sm:$0xff]
        %v363 = vld [vmem:[%s5 + $0x28] sm:$0xff]
        %v364 = vld [vmem:[%s5 + $0x30] sm:$0xff]
        %v365 = vld [vmem:[%s5 + $0x38] sm:$0xff]
        %v366 = vld [vmem:[%s2] sm:$0xff]
        %v367 = vld [vmem:[%s2 + $0x8] sm:$0xff]
        %v368 = vld [vmem:[%s2 + $0x10] sm:$0xff]
        %v369 = vld [vmem:[%s2 + $0x18] sm:$0xff]
        %v370 = vld [vmem:[%s3] sm:$0x1]
        %v371 = vld [vmem:[%s343] sm:$0xf]
        %v372 = vld [vmem:[%s335] sm:$0xff]
        %374 = vset.pattern.permute.xlu0 0
        %375 = vperm.xlu0 %374, %v358
        %v376 = vpop.permute.xlu0 %375
        %379 = vset.pattern.permute.xlu0 0
        %380 = vperm.xlu0 %379, %v359
        %v381 = vpop.permute.xlu0 %380
        %384 = vset.pattern.permute.xlu0 0
        %385 = vperm.xlu0 %384, %v360
        %v386 = vpop.permute.xlu0 %385
        %389 = vset.pattern.permute.xlu0 0
        %390 = vperm.xlu0 %389, %v361
        %v391 = vpop.permute.xlu0 %390
        %394 = vset.pattern.permute.xlu0 0
        %395 = vperm.xlu0 %394, %v362
        %v396 = vpop.permute.xlu0 %395
        %399 = vset.pattern.permute.xlu0 0
        %400 = vperm.xlu0 %399, %v363
        %v401 = vpop.permute.xlu0 %400
        %404 = vset.pattern.permute.xlu0 0
        %405 = vperm.xlu0 %404, %v364
        %v406 = vpop.permute.xlu0 %405
        %409 = vset.pattern.permute.xlu0 0
        %410 = vperm.xlu0 %409, %v365
        %v411 = vpop.permute.xlu0 %410
        %vm413 = vcmask 31744
        %v415 = vsel %vm413, %v350, 0
        %v418 = vsel %vm413, %v351, 0
        %v421 = vsel %vm413, %v352, 0
        %v424 = vsel %vm413, %v353, 0
        %v427 = vsel %vm413, %v354, 0
        %v430 = vsel %vm413, %v355, 0
        %v433 = vsel %vm413, %v356, 0
        %v436 = vsel %vm413, %v357, 0
        %vm438 = vcmask 1043456
        %v440 = vsel %vm438, %v371, 0
        %442 = vmatprep.subr.mxu0 0.0
        %443 = vmatpush1.msra.mxu0 %v440
        %444 = vmatprep.subr.mxu0 0.0
        %445 = vmatpush1.msra.mxu0 0.0
        %446 = vmatprep.subr.mxu0 0.0
        %447 = vmatpush1.msra.mxu0 0.0
        %448 = vmatprep.subr.mxu0 0.0
        %449 = vmatpush1.msra.mxu0 0.0
        %450 = vmatprep.subr.mxu0 0.0
        %451 = vmatpush1.msra.mxu0 0.0
        %452 = vmatprep.subr.mxu0 0.0
        %453 = vmatpush1.msra.mxu0 0.0
        %454 = vmatprep.subr.mxu0 0.0
        %455 = vmatpush1.msra.mxu0 0.0
        %456 = vmatprep.subr.mxu0 0.0
        %457 = vmatpush1.msra.mxu0 0.0
        %458 = vmatprep.subr.mxu0 0.0
        %459 = vmatpush1.msra.mxu0 0.0
        %460 = vmatprep.subr.mxu0 0.0
        %461 = vmatpush1.msra.mxu0 0.0
        %462 = vmatprep.subr.mxu0 0.0
        %463 = vmatpush1.msra.mxu0 0.0
        %464 = vmatprep.subr.mxu0 0.0
        %465 = vmatpush1.msra.mxu0 0.0
        %466 = vmatprep.subr.mxu0 0.0
        %467 = vmatpush1.msra.mxu0 0.0
        %468 = vmatprep.subr.mxu0 0.0
        %469 = vmatpush1.msra.mxu0 0.0
        %470 = vmatprep.subr.mxu0 0.0
        %471 = vmatpush1.msra.mxu0 0.0
        %472 = vmatprep.subr.mxu0 0.0
        %473 = vmatpush1.msra.mxu0 0.0
        %474 = vmatprep.subr.mxu0 0.0
        %475 = vmatpush1.msra.mxu0 0.0
        %476 = vmatprep.subr.mxu0 0.0
        %477 = vmatpush1.msra.mxu0 0.0
        %478 = vmatprep.subr.mxu0 0.0
        %479 = vmatpush1.msra.mxu0 0.0
        %480 = vmatprep.subr.mxu0 0.0
        %481 = vmatpush1.msra.mxu0 0.0
        %482 = vmatprep.subr.mxu0 0.0
        %483 = vmatpush1.msra.mxu0 0.0
        %484 = vmatprep.subr.mxu0 0.0
        %485 = vmatpush1.msra.mxu0 0.0
        %486 = vmatprep.subr.mxu0 0.0
        %487 = vmatpush1.msra.mxu0 0.0
        %488 = vmatprep.subr.mxu0 0.0
        %489 = vmatpush1.msra.mxu0 0.0
        %490 = vmatprep.subr.mxu0 0.0
        %491 = vmatpush1.msra.mxu0 0.0
        %492 = vmatprep.subr.mxu0 0.0
        %493 = vmatpush1.msra.mxu0 0.0
        %494 = vmatprep.subr.mxu0 0.0
        %495 = vmatpush1.msra.mxu0 0.0
        %496 = vmatprep.subr.mxu0 0.0
        %497 = vmatpush1.msra.mxu0 0.0
        %498 = vmatprep.subr.mxu0 0.0
        %499 = vmatpush1.msra.mxu0 0.0
        %500 = vmatprep.subr.mxu0 0.0
        %501 = vmatpush1.msra.mxu0 0.0
        %502 = vmatprep.subr.mxu0 0.0
        %503 = vmatpush1.msra.mxu0 0.0
        %504 = vmatprep.subr.mxu0 0.0
        %505 = vmatpush1.msra.mxu0 0.0
        %506 = vmatprep.mubr.f32.mxu0 0.0
        %507 = vmatmul.mubr.f32.gmra.mrb[0].mxu0 %v415
        %v508 = vpop.f32.mrb[0].mxu0
        %v509 = vadd.f32 %v376, %v508
        %v510 = vpop.f32.mrb[0].mxu0
        %511 = vmatprep.mubr.f32.mxu0 0.0
        %512 = vmatmul.mubr.f32.gmra.mrb[0].mxu0 %v418
        %v513 = vpop.f32.mrb[0].mxu0
        %v514 = vadd.f32 %v381, %v513
        %v515 = vpop.f32.mrb[0].mxu0
        %516 = vmatprep.mubr.f32.mxu0 0.0
        %517 = vmatmul.mubr.f32.gmra.mrb[0].mxu0 %v421
        %v518 = vpop.f32.mrb[0].mxu0
        %v519 = vadd.f32 %v386, %v518
        %v520 = vpop.f32.mrb[0].mxu0
        %521 = vmatprep.mubr.f32.mxu0 0.0
        %522 = vmatmul.mubr.f32.gmra.mrb[0].mxu0 %v424
        %v523 = vpop.f32.mrb[0].mxu0
        %v524 = vadd.f32 %v391, %v523
        %v525 = vpop.f32.mrb[0].mxu0
        %526 = vmatprep.mubr.f32.mxu0 0.0
        %527 = vmatmul.mubr.f32.gmra.mrb[0].mxu0 %v427
        %v528 = vpop.f32.mrb[0].mxu0
        %v529 = vadd.f32 %v396, %v528
        %v530 = vpop.f32.mrb[0].mxu0
        %531 = vmatprep.mubr.f32.mxu0 0.0
        %532 = vmatmul.mubr.f32.gmra.mrb[0].mxu0 %v430
        %v533 = vpop.f32.mrb[0].mxu0
        %v534 = vadd.f32 %v401, %v533
        %v535 = vpop.f32.mrb[0].mxu0
        %536 = vmatprep.mubr.f32.mxu0 0.0
        %537 = vmatmul.mubr.f32.gmra.mrb[0].mxu0 %v433
        %v538 = vpop.f32.mrb[0].mxu0
        %v539 = vadd.f32 %v406, %v538
        %v540 = vpop.f32.mrb[0].mxu0
        %541 = vmatprep.mubr.f32.mxu0 0.0
        %542 = vmatmul.mubr.f32.gmra.mrb[0].mxu0 %v436
        %v543 = vpop.f32.mrb[0].mxu0
        %v544 = vadd.f32 %v411, %v543
        %v545 = vpop.f32.mrb[0].mxu0
        %546 = vdwg.mxu0
        %v548 = vlaneseq
        %v549 = vshrl.u32 %v548, 7
        %v550 = vsub.s32 0, %v549
        %v551 = vrot.slane %v370, %v550
        %vm553 = vcmask 261120
        %v555 = vsel %vm553, %v372, 0
        %557 = vmatprep.subr.mxu0 0.0
        %558 = vmatpush1.msra.mxu0 %v366
        %559 = vmatprep.subr.mxu0 0.0
        %560 = vmatpush1.msra.mxu0 %v367
        %561 = vmatprep.subr.mxu0 0.0
        %562 = vmatpush1.msra.mxu0 %v368
        %563 = vmatprep.subr.mxu0 0.0
        %564 = vmatpush1.msra.mxu0 %v369
        %565 = vmatprep.subr.mxu0 0.0
        %566 = vmatpush1.msra.mxu0 0.0
        %567 = vmatprep.subr.mxu0 0.0
        %568 = vmatpush1.msra.mxu0 0.0
        %569 = vmatprep.subr.mxu0 0.0
        %570 = vmatpush1.msra.mxu0 0.0
        %571 = vmatprep.subr.mxu0 0.0
        %572 = vmatpush1.msra.mxu0 0.0
        %573 = vmatprep.subr.mxu0 0.0
        %574 = vmatpush1.msra.mxu0 0.0
        %575 = vmatprep.subr.mxu0 0.0
        %576 = vmatpush1.msra.mxu0 0.0
        %577 = vmatprep.subr.mxu0 0.0
        %578 = vmatpush1.msra.mxu0 0.0
        %579 = vmatprep.subr.mxu0 0.0
        %580 = vmatpush1.msra.mxu0 0.0
        %581 = vmatprep.subr.mxu0 0.0
        %582 = vmatpush1.msra.mxu0 0.0
        %583 = vmatprep.subr.mxu0 0.0
        %584 = vmatpush1.msra.mxu0 0.0
        %585 = vmatprep.subr.mxu0 0.0
        %586 = vmatpush1.msra.mxu0 0.0
        %587 = vmatprep.subr.mxu0 0.0
        %588 = vmatpush1.msra.mxu0 0.0
        %589 = vmatprep.subr.mxu0 0.0
        %590 = vmatpush1.msra.mxu0 0.0
        %591 = vmatprep.subr.mxu0 0.0
        %592 = vmatpush1.msra.mxu0 0.0
        %593 = vmatprep.subr.mxu0 0.0
        %594 = vmatpush1.msra.mxu0 0.0
        %595 = vmatprep.subr.mxu0 0.0
        %596 = vmatpush1.msra.mxu0 0.0
        %597 = vmatprep.subr.mxu0 0.0
        %598 = vmatpush1.msra.mxu0 0.0
        %599 = vmatprep.subr.mxu0 0.0
        %600 = vmatpush1.msra.mxu0 0.0
        %601 = vmatprep.subr.mxu0 0.0
        %602 = vmatpush1.msra.mxu0 0.0
        %603 = vmatprep.subr.mxu0 0.0
        %604 = vmatpush1.msra.mxu0 0.0
        %605 = vmatprep.subr.mxu0 0.0
        %606 = vmatpush1.msra.mxu0 0.0
        %607 = vmatprep.subr.mxu0 0.0
        %608 = vmatpush1.msra.mxu0 0.0
        %609 = vmatprep.subr.mxu0 0.0
        %610 = vmatpush1.msra.mxu0 0.0
        %611 = vmatprep.subr.mxu0 0.0
        %612 = vmatpush1.msra.mxu0 0.0
        %613 = vmatprep.subr.mxu0 0.0
        %614 = vmatpush1.msra.mxu0 0.0
        %615 = vmatprep.subr.mxu0 0.0
        %616 = vmatpush1.msra.mxu0 0.0
        %617 = vmatprep.subr.mxu0 0.0
        %618 = vmatpush1.msra.mxu0 0.0
        %619 = vmatprep.subr.mxu0 0.0
        %620 = vmatpush1.msra.mxu0 0.0
        %621 = vmatprep.mubr.f32.mxu0 0.0
        %622 = vmatmul.mubr.f32.gmra.mrb[0].mxu0 %v555
        %v623 = vpop.f32.mrb[0].mxu0
        %v624 = vadd.f32 %v551, %v623
        %v625 = vpop.f32.mrb[0].mxu0
        %626 = vdwg.mxu0
        %v628 = vsel %vm553, %v624, 0
        %630 = vmatprep.subr.mxu0 0.0
        %631 = vmatpush1.msra.mxu0 %v509
        %632 = vmatprep.subr.mxu0 0.0
        %633 = vmatpush1.msra.mxu0 %v514
        %634 = vmatprep.subr.mxu0 0.0
        %635 = vmatpush1.msra.mxu0 %v519
        %636 = vmatprep.subr.mxu0 0.0
        %637 = vmatpush1.msra.mxu0 %v524
        %638 = vmatprep.subr.mxu0 0.0
        %639 = vmatpush1.msra.mxu0 0.0
        %640 = vmatprep.subr.mxu0 0.0
        %641 = vmatpush1.msra.mxu0 0.0
        %642 = vmatprep.subr.mxu0 0.0
        %643 = vmatpush1.msra.mxu0 0.0
        %644 = vmatprep.subr.mxu0 0.0
        %645 = vmatpush1.msra.mxu0 0.0
        %646 = vmatprep.subr.mxu0 0.0
        %647 = vmatpush1.msra.mxu0 0.0
        %648 = vmatprep.subr.mxu0 0.0
        %649 = vmatpush1.msra.mxu0 0.0
        %650 = vmatprep.subr.mxu0 0.0
        %651 = vmatpush1.msra.mxu0 0.0
        %652 = vmatprep.subr.mxu0 0.0
        %653 = vmatpush1.msra.mxu0 0.0
        %654 = vmatprep.subr.mxu0 0.0
        %655 = vmatpush1.msra.mxu0 0.0
        %656 = vmatprep.subr.mxu0 0.0
        %657 = vmatpush1.msra.mxu0 0.0
        %658 = vmatprep.subr.mxu0 0.0
        %659 = vmatpush1.msra.mxu0 0.0
        %660 = vmatprep.subr.mxu0 0.0
        %661 = vmatpush1.msra.mxu0 0.0
        %662 = vmatprep.subr.mxu0 0.0
        %663 = vmatpush1.msra.mxu0 0.0
        %664 = vmatprep.subr.mxu0 0.0
        %665 = vmatpush1.msra.mxu0 0.0
        %666 = vmatprep.subr.mxu0 0.0
        %667 = vmatpush1.msra.mxu0 0.0
        %668 = vmatprep.subr.mxu0 0.0
        %669 = vmatpush1.msra.mxu0 0.0
        %670 = vmatprep.subr.mxu0 0.0
        %671 = vmatpush1.msra.mxu0 0.0
        %672 = vmatprep.subr.mxu0 0.0
        %673 = vmatpush1.msra.mxu0 0.0
        %674 = vmatprep.subr.mxu0 0.0
        %675 = vmatpush1.msra.mxu0 0.0
        %676 = vmatprep.subr.mxu0 0.0
        %677 = vmatpush1.msra.mxu0 0.0
        %678 = vmatprep.subr.mxu0 0.0
        %679 = vmatpush1.msra.mxu0 0.0
        %680 = vmatprep.subr.mxu0 0.0
        %681 = vmatpush1.msra.mxu0 0.0
        %682 = vmatprep.subr.mxu0 0.0
        %683 = vmatpush1.msra.mxu0 0.0
        %684 = vmatprep.subr.mxu0 0.0
        %685 = vmatpush1.msra.mxu0 0.0
        %686 = vmatprep.subr.mxu0 0.0
        %687 = vmatpush1.msra.mxu0 0.0
        %688 = vmatprep.subr.mxu0 0.0
        %689 = vmatpush1.msra.mxu0 0.0
        %690 = vmatprep.subr.mxu0 0.0
        %691 = vmatpush1.msra.mxu0 0.0
        %692 = vmatprep.subr.mxu0 0.0
        %693 = vmatpush1.msra.mxu0 0.0
        %694 = vmatprep.mubr.f32.mxu0 0.0
        %695 = vmatmul.mubr.f32.gmra.mrb[0].mxu0 %v628
        %v696 = vpop.f32.mrb[0].mxu0
        %v697 = vadd.f32 0.0, %v696
        %v698 = vpop.f32.mrb[0].mxu0
        %699 = vdwg.mxu0
        %v700 = vmul.f32 %v697, 0.17677669
        %v701 = vrot.slane %v700, 4
        %v702 = vmax.f32 %v700, %v701
        %v703 = vrot.slane %v702, 2
        %v704 = vmax.f32 %v702, %v703
        %v705 = vrot.slane %v704, 1
        %v706 = vmax.f32 %v704, %v705
        %v707 = vsub.f32 %v700, %v706
        %v708 = vmul.f32 %v707, 1.442695
        %v709 = vpow.pop %v708
        %v710 = vrot.slane %v709, 4
        %v711 = vadd.f32 %v709, %v710
        %v712 = vrot.slane %v711, 2
        %v713 = vadd.f32 %v711, %v712
        %v714 = vrot.slane %v713, 1
        %v715 = vadd.f32 %v713, %v714
        %v716 = vrcp.pop %v715
        %v717 = vmul.f32 %v709, %v716
        %v718 = vld [vmem:[#allocation2] sm:$0xff]
        %719 = vmatprep.subr.mxu0 0.0
        %720 = vmatpush1.xpose.msra.mxu0 %v529
        %721 = vmatprep.subr.mxu0 0.0
        %722 = vmatpush1.xpose.msra.mxu0 %v534
        %723 = vmatprep.subr.mxu0 0.0
        %724 = vmatpush1.xpose.msra.mxu0 %v539
        %725 = vmatprep.subr.mxu0 0.0
        %726 = vmatpush1.xpose.msra.mxu0 %v544
        %727 = vmatprep.subr.mxu0 0.0
        %728 = vmatpush1.xpose.msra.mxu0 0.0
        %729 = vmatprep.subr.mxu0 0.0
        %730 = vmatpush1.xpose.msra.mxu0 0.0
        %731 = vmatprep.subr.mxu0 0.0
        %732 = vmatpush1.xpose.msra.mxu0 0.0
        %733 = vmatprep.subr.mxu0 0.0
        %734 = vmatpush1.xpose.msra.mxu0 0.0
        %735 = vmatprep.subr.mxu0 0.0
        %736 = vmatpush1.xpose.msra.mxu0 0.0
        %737 = vmatprep.subr.mxu0 0.0
        %738 = vmatpush1.xpose.msra.mxu0 0.0
        %739 = vmatprep.subr.mxu0 0.0
        %740 = vmatpush1.xpose.msra.mxu0 0.0
        %741 = vmatprep.subr.mxu0 0.0
        %742 = vmatpush1.xpose.msra.mxu0 0.0
        %743 = vmatprep.subr.mxu0 0.0
        %744 = vmatpush1.xpose.msra.mxu0 0.0
        %745 = vmatprep.subr.mxu0 0.0
        %746 = vmatpush1.xpose.msra.mxu0 0.0
        %747 = vmatprep.subr.mxu0 0.0
        %748 = vmatpush1.xpose.msra.mxu0 0.0
        %749 = vmatprep.subr.mxu0 0.0
        %750 = vmatpush1.xpose.msra.mxu0 0.0
        %751 = vmatprep.subr.mxu0 0.0
        %752 = vmatpush1.xpose.msra.mxu0 0.0
        %753 = vmatprep.subr.mxu0 0.0
        %754 = vmatpush1.xpose.msra.mxu0 0.0
        %755 = vmatprep.subr.mxu0 0.0
        %756 = vmatpush1.xpose.msra.mxu0 0.0
        %757 = vmatprep.subr.mxu0 0.0
        %758 = vmatpush1.xpose.msra.mxu0 0.0
        %759 = vmatprep.subr.mxu0 0.0
        %760 = vmatpush1.xpose.msra.mxu0 0.0
        %761 = vmatprep.subr.mxu0 0.0
        %762 = vmatpush1.xpose.msra.mxu0 0.0
        %763 = vmatprep.subr.mxu0 0.0
        %764 = vmatpush1.xpose.msra.mxu0 0.0
        %765 = vmatprep.subr.mxu0 0.0
        %766 = vmatpush1.xpose.msra.mxu0 0.0
        %767 = vmatprep.subr.mxu0 0.0
        %768 = vmatpush1.xpose.msra.mxu0 0.0
        %769 = vmatprep.subr.mxu0 0.0
        %770 = vmatpush1.xpose.msra.mxu0 0.0
        %771 = vmatprep.subr.mxu0 0.0
        %772 = vmatpush1.xpose.msra.mxu0 0.0
        %773 = vmatprep.subr.mxu0 0.0
        %774 = vmatpush1.xpose.msra.mxu0 0.0
        %775 = vmatprep.subr.mxu0 0.0
        %776 = vmatpush1.xpose.msra.mxu0 0.0
        %777 = vmatprep.subr.mxu0 0.0
        %778 = vmatpush1.xpose.msra.mxu0 0.0
        %779 = vmatprep.subr.mxu0 0.0
        %780 = vmatpush1.xpose.msra.mxu0 0.0
        %781 = vmatprep.subr.mxu0 0.0
        %782 = vmatpush1.xpose.msra.mxu0 0.0
        %783 = vmatprep.mubr.f32.mxu0 0.0
        %784 = vmatmul.mubr.f32.gmra.mrb[0].mxu0 %v717
        %v785 = vpop.f32.mrb[0].mxu0
        %v786 = vadd.f32 0.0, %v785
        %v787 = vpop.f32.mrb[0].mxu0
        %788 = vdwg.mxu0
        %v789 = vadd.f32 %v718, %v786
        %790 = vst.msk [vmem:[#allocation2] sm:$0xff] %vm553, %v789
        %p791 = scmp.eq.s32.totalorder %s27, 1
        // Predicated region
        $region57: #{tpu_custom_call.1} parent=51 // pred_check
          %p792 = pneg %p791
        $region58: #{tpu_custom_call.1} parent=51 // pred_check_branch
          %794 = sbr.rel (%p792) target = $region60
        $region59: #{tpu_custom_call.1} parent=51 // pred_region
          %v795 = vld [vmem:[%s6] sm:$0xff]
          %v796 = vld [vmem:[%s6 + $0x8] sm:$0xff]
          %v797 = vld [vmem:[%s6 + $0x10] sm:$0xff]
          %v798 = vld [vmem:[%s6 + $0x18] sm:$0xff]
          %v799 = vld [vmem:[%s7] sm:$0x1]
          %v800 = vld [vmem:[#allocation2] sm:$0xff]
          %v802 = vlaneseq
          %v803 = vshrl.u32 %v802, 7
          %v804 = vsub.s32 0, %v803
          %v805 = vrot.slane %v799, %v804
          %v808 = vsel %vm553, %v800, 0
          %810 = vmatprep.subr.mxu0 0.0
          %811 = vmatpush1.msra.mxu0 %v795
          %812 = vmatprep.subr.mxu0 0.0
          %813 = vmatpush1.msra.mxu0 %v796
          %814 = vmatprep.subr.mxu0 0.0
          %815 = vmatpush1.msra.mxu0 %v797
          %816 = vmatprep.subr.mxu0 0.0
          %817 = vmatpush1.msra.mxu0 %v798
          %818 = vmatprep.subr.mxu0 0.0
          %819 = vmatpush1.msra.mxu0 0.0
          %820 = vmatprep.subr.mxu0 0.0
          %821 = vmatpush1.msra.mxu0 0.0
          %822 = vmatprep.subr.mxu0 0.0
          %823 = vmatpush1.msra.mxu0 0.0
          %824 = vmatprep.subr.mxu0 0.0
          %825 = vmatpush1.msra.mxu0 0.0
          %826 = vmatprep.subr.mxu0 0.0
          %827 = vmatpush1.msra.mxu0 0.0
          %828 = vmatprep.subr.mxu0 0.0
          %829 = vmatpush1.msra.mxu0 0.0
          %830 = vmatprep.subr.mxu0 0.0
          %831 = vmatpush1.msra.mxu0 0.0
          %832 = vmatprep.subr.mxu0 0.0
          %833 = vmatpush1.msra.mxu0 0.0
          %834 = vmatprep.subr.mxu0 0.0
          %835 = vmatpush1.msra.mxu0 0.0
          %836 = vmatprep.subr.mxu0 0.0
          %837 = vmatpush1.msra.mxu0 0.0
          %838 = vmatprep.subr.mxu0 0.0
          %839 = vmatpush1.msra.mxu0 0.0
          %840 = vmatprep.subr.mxu0 0.0
          %841 = vmatpush1.msra.mxu0 0.0
          %842 = vmatprep.subr.mxu0 0.0
          %843 = vmatpush1.msra.mxu0 0.0
          %844 = vmatprep.subr.mxu0 0.0
          %845 = vmatpush1.msra.mxu0 0.0
          %846 = vmatprep.subr.mxu0 0.0
          %847 = vmatpush1.msra.mxu0 0.0
          %848 = vmatprep.subr.mxu0 0.0
          %849 = vmatpush1.msra.mxu0 0.0
          %850 = vmatprep.subr.mxu0 0.0
          %851 = vmatpush1.msra.mxu0 0.0
          %852 = vmatprep.subr.mxu0 0.0
          %853 = vmatpush1.msra.mxu0 0.0
          %854 = vmatprep.subr.mxu0 0.0
          %855 = vmatpush1.msra.mxu0 0.0
          %856 = vmatprep.subr.mxu0 0.0
          %857 = vmatpush1.msra.mxu0 0.0
          %858 = vmatprep.subr.mxu0 0.0
          %859 = vmatpush1.msra.mxu0 0.0
          %860 = vmatprep.subr.mxu0 0.0
          %861 = vmatpush1.msra.mxu0 0.0
          %862 = vmatprep.subr.mxu0 0.0
          %863 = vmatpush1.msra.mxu0 0.0
          %864 = vmatprep.subr.mxu0 0.0
          %865 = vmatpush1.msra.mxu0 0.0
          %866 = vmatprep.subr.mxu0 0.0
          %867 = vmatpush1.msra.mxu0 0.0
          %868 = vmatprep.subr.mxu0 0.0
          %869 = vmatpush1.msra.mxu0 0.0
          %870 = vmatprep.subr.mxu0 0.0
          %871 = vmatpush1.msra.mxu0 0.0
          %872 = vmatprep.subr.mxu0 0.0
          %873 = vmatpush1.msra.mxu0 0.0
          %874 = vmatprep.mubr.f32.mxu0 0.0
          %875 = vmatmul.mubr.f32.gmra.mrb[0].mxu0 %v808
          %v876 = vpop.f32.mrb[0].mxu0
          %v877 = vadd.f32 %v805, %v876
          %v878 = vpop.f32.mrb[0].mxu0
          %879 = vdwg.mxu0
          %v880 = vld [vmem:[%s335] sm:$0xff]
          %v881 = vadd.f32 %v880, %v877
          %882 = vst.msk [vmem:[%s331] sm:$0xff] %vm553, %v881
        $region60: #{tpu_custom_call.1} parent=51 // pred_fallthru
          _
        %s883 = sand.u32 %s222, 1
        %s884 = scalar_lea.sflag [#allocation4], %s883
        %s885 = sand.u32 %s222, 1
        %s886 = smul.addr %s885, 8
        %s887 = scalar_lea.vmem [#allocation3], %s886
        // Predicated region
        $region61: #{tpu_custom_call.1} parent=51 // pred_check
          %p888 = pneg %p232
        $region62: #{tpu_custom_call.1} parent=51 // pred_check_branch
          %890 = sbr.rel (%p888) target = $region64
        $region63: #{tpu_custom_call.1} parent=51 // pred_region
          %s892 = ssub.s32 128, 128
          %893 = vsyncadd %s884, %s892
          %s894 = smul.addr %s26, 128
          %s895 = scalar_lea.hbm %s8, %s894
          %s897 = sshll.u32 %s887, 4
          %s898 = int_to_ptr.vmem [resolvable:$true] %s897
          %900 = dma.vmem_to_hbm [thread:$0]  %s898, 128, %s895, %s884
        $region64: #{tpu_custom_call.1} parent=51 // pred_fallthru
          _
      $region52: #{tpu_custom_call.1} parent=5 // pred_fallthru
        _
      %p901 = scmp.le.s32.totalorder 2, %s17
      // Predicated region
      $region65: #{tpu_custom_call.1} parent=5 // pred_check
        %p902 = pneg %p901
      $region66: #{tpu_custom_call.1} parent=5 // pred_check_branch
        %904 = sbr.rel (%p902) target = $region68
      $region67: #{tpu_custom_call.1} parent=5 // pred_region
        %s905 = ssub.s32 %s17, 2
        // Predicated region
        $region69: #{tpu_custom_call.1} parent=67 // pred_check
          %p906 = pneg %p238
        $region70: #{tpu_custom_call.1} parent=67 // pred_check_branch
          %908 = sbr.rel (%p906) target = $region72
        $region71: #{tpu_custom_call.1} parent=67 // pred_region
          %s909 = sand.u32 %s223, 1
          %s910 = scalar_lea.sflag [#allocation4], %s909
          %s911 = sand.u32 %s223, 1
          %s912 = smul.addr %s911, 8
          %s913 = scalar_lea.vmem [#allocation3], %s912
          %914 = dma.done %s910, 128
        $region72: #{tpu_custom_call.1} parent=67 // pred_fallthru
          _
      $region68: #{tpu_custom_call.1} parent=5 // pred_fallthru
        _
    $region6: #{tpu_custom_call.1} parent=1 // loop_footer
      %s21 = sadd.s32 1, %s17
    $region7: #{tpu_custom_call.1} parent=1 // loop_footer_branch
      %16 = sbr.rel target = $region3
    $region8: #{tpu_custom_call.1} parent=1 // loop_exit
      _
    %915 = vsyncpa [#allocation4], 1
    %s916 = scalar_lea.sflag [#allocation4], 1
    %917 = vsyncpa %s916, 1

</llo_original>
